<compile_context>
chip_gen: v7x
topology: tpu7x:2x2x1
jax: 0.10.0
libtpu: 0.0.40
codegen_flags: <defaults>
</compile_context>

<pallas_src>
import functools

import jax
import jax.numpy as jnp
from jax import lax
from jax.experimental import pallas as pl
from jax.experimental.pallas import tpu as pltpu


def _round_up(n, m):
    return ((n + m - 1) // m) * m


@functools.lru_cache(maxsize=None)
def _vmem_budget():
    """Returns (vmem_limit_bytes to request, byte budget for tile sizing)."""
    phys = 64 << 20                          # conservative fallback (v7x per-core VMEM)
    try:
        info = pltpu.get_tpu_info()
        cap = getattr(info, "vmem_capacity_bytes", None)
        if cap:
            phys = int(cap)
    except Exception:                        # old runtime / non-TPU trace context
        pass
    limit = min(phys * 3 // 4, 100 << 20)    # ~96 MiB on v5e/v6e, ~48 MiB on v7x
    budget = int(limit * 0.8)                # headroom for compiler scratch / spills
    return int(limit), budget


def _pick_tm(m_rows, k, e, out_bytes, budget):
    """Largest multiple-of-16 M tile that fits the VMEM budget, counting the
    double-buffering Pallas applies to every input (incl. the resident weight),
    capped at 1024 rows and forced to give >= 2 grid steps when M allows (v7x
    megacore sharding)."""
    fixed = 2 * (k * e * 2 + e * 4)              # 2x (bf16 weight + f32 bias) buffers
    per_row = 2 * (k * 2 + e * out_bytes)        # 2x (bf16 input row + output row)
    tm = max((budget - fixed) // max(per_row, 1), 16)
    tm = min(tm, 1024)
    m_pad = _round_up(max(m_rows, 16), 16)
    target = m_pad if m_pad < 32 else (m_pad + 1) // 2   # >= 2 grid steps if possible
    tm = min(tm, _round_up(target, 16))
    return int(max((tm // 16) * 16, 16))


def _patch_proj_kernel(x_ref, w_ref, b_ref, o_ref):
    # x_ref: (TM, K) bf16 patch tile;  w_ref: (E, K) bf16 resident weight;
    # b_ref: (1, E) f32 bias row;      o_ref: (TM, E) output tile.
    acc = lax.dot_general(
        x_ref[...], w_ref[...],
        dimension_numbers=(((1,), (1,)), ((), ())),   # contract K with K (weight kept (E, K))
        preferred_element_type=jnp.float32)
    o_ref[...] = (acc + b_ref[...]).astype(o_ref.dtype)


@functools.partial(jax.jit, static_argnums=(3,))
def patch_embed_2d(x, weight, bias, patch_size):
    """x: (B, C, H, W).  weight: (E, C, p, p).  bias: (E,).
    Returns (B, H//p, W//p, E)  == PyTorch proj(x).permute(0, 2, 3, 1)."""
    B, C, H, W = x.shape
    E = weight.shape[0]
    p = patch_size
    Hp, Wp = H // p, W // p
    M, K = B * Hp * Wp, C * p * p

    limit, budget = _vmem_budget()
    TM = _pick_tm(M, K, E, x.dtype.itemsize, budget)
    MP = _round_up(max(M, TM), TM)

    # --- patch extraction, flattened in (c, ph, pw) order to match the conv weight.
    # One fused XLA transpose that directly emits the bf16 operand (the f32 patch
    # matrix never round-trips HBM).
    # TODO(synk): fuse this transpose into the kernel itself; for p < 8 it needs a
    # sublane-granularity (Wp, p) -> K relayout that Mosaic does not lower robustly,
    # so it stays on the XLA side for now.
    xp = x.reshape(B, C, Hp, p, Wp, p)
    xp = jnp.transpose(xp, (0, 2, 4, 1, 3, 5))            # (B, Hp, Wp, C, p, p)
    patches = xp.reshape(M, K).astype(jnp.bfloat16)
    if MP != M:
        patches = jnp.pad(patches, ((0, MP - M), (0, 0)))

    w_ek = weight.reshape(E, K).astype(jnp.bfloat16)      # free reshape + tiny cast
    b_row = bias.reshape(1, E).astype(jnp.float32)

    # --- Pallas hot path: M-tiled bf16 projection matmul + f32 bias on the MXU ---
    out = pl.pallas_call(
        _patch_proj_kernel,
        out_shape=jax.ShapeDtypeStruct((MP, E), x.dtype),
        grid_spec=pltpu.PrefetchScalarGridSpec(
            num_scalar_prefetch=0,
            grid=(MP // TM,),
            in_specs=[
                pl.BlockSpec((TM, K), lambda i: (i, 0)),   # patches: tiled over M
                pl.BlockSpec((E, K), lambda i: (0, 0)),    # weight: resident, full dims
                pl.BlockSpec((1, E), lambda i: (0, 0)),    # bias: resident
            ],
            out_specs=pl.BlockSpec((TM, E), lambda i: (i, 0)),
        ),
        compiler_params=pltpu.CompilerParams(
            dimension_semantics=("parallel",),             # megacore-shard M on v7x
            vmem_limit_bytes=limit),
    )(patches, w_ek, b_row)

    if MP != M:
        out = out[:M]
    return out.reshape(B, Hp, Wp, E)


if __name__ == "__main__":
    # Small shapes consistent with the module: patch_size=4, in_chans=4,
    # embed_dim=32, input 2x4x16x16 (NCHW).
    B, C, H, W = 2, 4, 16, 16
    patch = 4
    embed_dim = 32

    key = jax.random.PRNGKey(0)
    kx, kw, kb = jax.random.split(key, 3)
    x = jax.random.normal(kx, (B, C, H, W), dtype=jnp.float32)
    weight = jax.random.normal(kw, (embed_dim, C, patch, patch), dtype=jnp.float32) * 0.05
    bias = jax.random.normal(kb, (embed_dim,), dtype=jnp.float32) * 0.05

    out = patch_embed_2d(x, weight, bias, patch)
    out = jax.block_until_ready(out)

    # Reference: XLA strided conv (== nn.Conv2d stride=kernel) + permute.  Inputs
    # are rounded to bf16 to mirror the kernel's bf16 MXU operands (f32 accumulation).
    xq = x.astype(jnp.bfloat16).astype(jnp.float32)
    wq = weight.astype(jnp.bfloat16).astype(jnp.float32)
    ref = lax.conv_general_dilated(
        xq, wq, window_strides=(patch, patch), padding="VALID",
        dimension_numbers=("NCHW", "OIHW", "NCHW"))
    ref = jnp.transpose(ref, (0, 2, 3, 1)) + bias.reshape(1, 1, 1, -1)

    assert out.shape == (B, H // patch, W // patch, embed_dim)
    assert jnp.allclose(out, ref, atol=1e-2, rtol=1e-2)

    print("KERNEL_OK")
</pallas_src>

<mosaic_0001>
module attributes {stable_mosaic.version = 11 : i64} {
  func.func @_patch_proj_kernel(%arg0: i32, %arg1: memref<16x64xbf16, #tpu.memory_space<vmem>>, %arg2: memref<32x64xbf16, #tpu.memory_space<vmem>>, %arg3: memref<1x32xf32, #tpu.memory_space<vmem>>, %arg4: memref<16x32xf32, #tpu.memory_space<vmem>>) attributes {dimension_semantics = [#tpu.dimension_semantics<parallel>], iteration_bounds = array<i64: 2>, scalar_prefetch = 0 : i64, scratch_operands = 0 : i64, tpu.core_type = #tpu.core_type<tc>, window_params = [{transform_indices = @transform_0, window_bounds = array<i64: 16, 64>}, {pipeline_mode = #tpu.pipeline_mode<synchronous>, transform_indices = @transform_1, window_bounds = array<i64: 32, 64>}, {pipeline_mode = #tpu.pipeline_mode<synchronous>, transform_indices = @transform_2, window_bounds = array<i64: 1, 32>}, {transform_indices = @transform_3, window_bounds = array<i64: 16, 32>}]} {
    %c0 = arith.constant 0 : index
    %c0_0 = arith.constant 0 : index
    %0 = vector.load %arg1[%c0, %c0_0] : memref<16x64xbf16, #tpu.memory_space<vmem>>, vector<16x64xbf16>
    %c0_1 = arith.constant 0 : index
    %c0_2 = arith.constant 0 : index
    %1 = vector.load %arg2[%c0_1, %c0_2] : memref<32x64xbf16, #tpu.memory_space<vmem>>, vector<32x64xbf16>
    %cst = arith.constant dense<0.000000e+00> : vector<16x32xf32>
    %2 = tpu.matmul %0, %1, %cst {dimension_numbers = #tpu.dot_dimension_numbers<[1], [1], [0], [0], [0, 0, 1, 0], [], []>} : vector<16x64xbf16>, vector<32x64xbf16>, vector<16x32xf32> -> vector<16x32xf32>
    %c0_3 = arith.constant 0 : index
    %c0_4 = arith.constant 0 : index
    %3 = vector.load %arg3[%c0_3, %c0_4] : memref<1x32xf32, #tpu.memory_space<vmem>>, vector<1x32xf32>
    %4 = vector.broadcast %3 : vector<1x32xf32> to vector<16x32xf32>
    %5 = arith.addf %2, %4 : vector<16x32xf32>
    %c0_5 = arith.constant 0 : index
    %c0_6 = arith.constant 0 : index
    %6 = vector.load %arg4[%c0_5, %c0_6] : memref<16x32xf32, #tpu.memory_space<vmem>>, vector<16x32xf32>
    tpu.vector_store %arg4[%c0_5, %c0_6], %5 {strides = array<i32>} : memref<16x32xf32, #tpu.memory_space<vmem>>, vector<16x32xf32>,
    return
  }
  func.func @transform_0(%arg0: i32) -> (i32, i32) {
    %c0_i32 = arith.constant 0 : i32
    %c0_i32_0 = arith.constant 0 : i32
    return %arg0, %c0_i32 : i32, i32
  }
  func.func @transform_1(%arg0: i32) -> (i32, i32) {
    %c0_i32 = arith.constant 0 : i32
    %c0_i32_0 = arith.constant 0 : i32
    %c0_i32_1 = arith.constant 0 : i32
    return %c0_i32, %c0_i32_0 : i32, i32
  }
  func.func @transform_2(%arg0: i32) -> (i32, i32) {
    %c0_i32 = arith.constant 0 : i32
    %c0_i32_0 = arith.constant 0 : i32
    %c0_i32_1 = arith.constant 0 : i32
    return %c0_i32, %c0_i32_0 : i32, i32
  }
  func.func @transform_3(%arg0: i32) -> (i32, i32) {
    %c0_i32 = arith.constant 0 : i32
    %c0_i32_0 = arith.constant 0 : i32
    return %arg0, %c0_i32 : i32, i32
  }
}

</mosaic_0001>

<llo_original>
// kernel: patch_embed_2d.1
$region0: #{patch_embed_2d.1}
  #allocation0 [shape = 'u32[]', space=smem, size = 0x4, offset = 0x4, fixed_abs, tag = 'smem constant byte address 0x4 - core index']
  #allocation1 [shape = 'u32[144,128]{1,0:T(1,128)}', space=vmem, size = 0x12000, scoped, tag = 'internal scratch']
  %s0 = inlined_call_operand.vmem [shape: bf16[32,64], index: 0, kind: input, shape index: {}]
  %s1 = inlined_call_operand.vmem [shape: bf16[32,64], index: 1, kind: input, shape index: {}]
  %s2 = inlined_call_operand.vmem [shape: f32[1,32], index: 2, kind: input, shape index: {}]
  %s3 = inlined_call_operand.hbm [shape: f32[32,32], index: 3, kind: output, shape index: {}]
  %s4 = sld [smem:[#allocation0]]
  $region45: #{patch_embed_2d.1} parent=0
    _
  %s6 = ssub.s32 1, %s4
  %s7 = scalar_select 0, %s6, %s4
  $region1: #{patch_embed_2d.1} parent=0
    #allocation2 [shape = 'u8[16384]{0}', space=vmem, size = 0x4000, scoped, tag = 'output window, operand 0']
    #allocation3 [shape = 's32[2]{0}', space=sflag, size = 0x8, scoped, tag = 'scoped memory for patch_embed_2d.1']
    %8 = vsyncpa [#allocation3], 0
    %s9 = scalar_lea.sflag [#allocation3], 1
    %10 = vsyncpa %s9, 0
    loop: start=0, step=1, limit=4
    $region2: #{patch_embed_2d.1} parent=1 // loop_pre_header
      _
    $region3: #{patch_embed_2d.1} parent=1 // loop_header
      %s12 = sphi 0, %s16
      %p13 = scmp.ge.s32.totalorder %s12, 4
      %s22 = sphi 0, %s24
      %s25 = sphi 0, %s22
      %s26 = sphi 0, %s25
      %s42 = sphi 0, %s26
      %s46 = sphi 0, %s46
      %s48 = sphi 0, %s46
      %s49 = sphi 0, %s48
      %s63 = sphi 0, %s49
      %s67 = sphi 0, %s67
      %s69 = sphi 0, %s67
      %s70 = sphi 0, %s69
      %s84 = sphi 0, %s70
      %s90 = sphi 0, %s92
      %s93 = sphi 0, %s90
      %s94 = sphi 0, %s93
      %s110 = sphi 0, %s94
    $region4: #{patch_embed_2d.1} parent=1 // loop_header_branch
      %15 = sbr.rel (%p13) target = $region8
    $region5: #{patch_embed_2d.1} parent=1 // loop_body
      %s17 = ssub.s32 %s12, 1
      %s18 = ssub.s32 %s12, 2
      %s19 = sadd.s32 %s12, 1
      %s20 = ssub.s32 %s12, %s19
      %p21 = scmp.eq.s32.totalorder %s20, 0
      %s23 = sadd.s32 %s22, 1
      %s24 = scalar_select %p21, %s22, %s23
      %p27 = pneg %p21
      %p28 = scmp.eq.s32.totalorder %s12, 1
      %p29 = por %p27, %p28
      %p30 = scmp.ne.s32.totalorder %s22, %s25
      %p31 = scmp.eq.s32.totalorder %s12, 0
      %p32 = por %p30, %p31
      %p33 = scmp.ne.s32.totalorder %s22, %s25
      %p34 = scmp.eq.s32.totalorder %s17, 1
      %p35 = por %p33, %p34
      %p36 = scmp.ne.s32.totalorder %s25, %s26
      %p37 = scmp.eq.s32.totalorder %s17, 0
      %p38 = por %p36, %p37
      %p39 = scmp.ne.s32.totalorder %s25, %s26
      %p40 = scmp.eq.s32.totalorder %s18, 1
      %p41 = por %p39, %p40
      %p43 = scmp.ne.s32.totalorder %s26, %s42
      %p44 = scmp.eq.s32.totalorder %s18, 0
      %p45 = por %p43, %p44
      %s47 = sadd.s32 %s46, 1
      %p50 = scmp.eq.s32.totalorder %s12, 1
      %p51 = scmp.ne.s32.totalorder %s46, %s48
      %p52 = scmp.eq.s32.totalorder %s12, 0
      %p53 = por %p51, %p52
      %p54 = scmp.ne.s32.totalorder %s46, %s48
      %p55 = scmp.eq.s32.totalorder %s17, 1
      %p56 = por %p54, %p55
      %p57 = scmp.ne.s32.totalorder %s48, %s49
      %p58 = scmp.eq.s32.totalorder %s17, 0
      %p59 = por %p57, %p58
      %p60 = scmp.ne.s32.totalorder %s48, %s49
      %p61 = scmp.eq.s32.totalorder %s18, 1
      %p62 = por %p60, %p61
      %p64 = scmp.ne.s32.totalorder %s49, %s63
      %p65 = scmp.eq.s32.totalorder %s18, 0
      %p66 = por %p64, %p65
      %s68 = sadd.s32 %s67, 1
      %p71 = scmp.eq.s32.totalorder %s12, 1
      %p72 = scmp.ne.s32.totalorder %s67, %s69
      %p73 = scmp.eq.s32.totalorder %s12, 0
      %p74 = por %p72, %p73
      %p75 = scmp.ne.s32.totalorder %s67, %s69
      %p76 = scmp.eq.s32.totalorder %s17, 1
      %p77 = por %p75, %p76
      %p78 = scmp.ne.s32.totalorder %s69, %s70
      %p79 = scmp.eq.s32.totalorder %s17, 0
      %p80 = por %p78, %p79
      %p81 = scmp.ne.s32.totalorder %s69, %s70
      %p82 = scmp.eq.s32.totalorder %s18, 1
      %p83 = por %p81, %p82
      %p85 = scmp.ne.s32.totalorder %s70, %s84
      %p86 = scmp.eq.s32.totalorder %s18, 0
      %p87 = por %p85, %p86
      %s88 = ssub.s32 %s12, %s19
      %p89 = scmp.eq.s32.totalorder %s88, 0
      %s91 = sadd.s32 %s90, 1
      %s92 = scalar_select %p89, %s90, %s91
      %p95 = pneg %p89
      %p96 = scmp.eq.s32.totalorder %s12, 1
      %p97 = por %p95, %p96
      %p98 = scmp.ne.s32.totalorder %s90, %s93
      %p99 = scmp.eq.s32.totalorder %s12, 0
      %p100 = por %p98, %p99
      %p101 = scmp.ne.s32.totalorder %s90, %s93
      %p102 = scmp.eq.s32.totalorder %s17, 1
      %p103 = por %p101, %p102
      %p104 = scmp.ne.s32.totalorder %s93, %s94
      %p105 = scmp.eq.s32.totalorder %s17, 0
      %p106 = por %p104, %p105
      %p107 = scmp.ne.s32.totalorder %s93, %s94
      %p108 = scmp.eq.s32.totalorder %s18, 1
      %p109 = por %p107, %p108
      %p111 = scmp.ne.s32.totalorder %s94, %s110
      %p112 = scmp.eq.s32.totalorder %s18, 0
      %p113 = por %p111, %p112
      %p114 = scmp.le.s32.totalorder 1, %s12
      %p115 = scmp.lt.s32.totalorder %s12, 3
      %p116 = pnand %p114, %p115
      %p117 = pneg %p116
      // Predicated region
      $region9: #{patch_embed_2d.1} parent=5 // pred_check
        _
      $region10: #{patch_embed_2d.1} parent=5 // pred_check_branch
        %119 = sbr.rel (%p116) target = $region12
      $region11: #{patch_embed_2d.1} parent=5 // pred_region
        %s120 = ssub.s32 %s12, 1
        // Predicated region
        $region13: #{patch_embed_2d.1} parent=11 // pred_check
          %p121 = pneg %p59
        $region14: #{patch_embed_2d.1} parent=11 // pred_check_branch
          %123 = sbr.rel (%p121) target = $region16
        $region15: #{patch_embed_2d.1} parent=11 // pred_region
          _
        $region16: #{patch_embed_2d.1} parent=11 // pred_fallthru
          _
        // Predicated region
        $region17: #{patch_embed_2d.1} parent=11 // pred_check
          %p124 = pneg %p80
        $region18: #{patch_embed_2d.1} parent=11 // pred_check_branch
          %126 = sbr.rel (%p124) target = $region20
        $region19: #{patch_embed_2d.1} parent=11 // pred_region
          _
        $region20: #{patch_embed_2d.1} parent=11 // pred_fallthru
          _
      $region12: #{patch_embed_2d.1} parent=5 // pred_fallthru
        _
      %p127 = scmp.lt.s32.totalorder %s12, 2
      // Predicated region
      $region21: #{patch_embed_2d.1} parent=5 // pred_check
        %p128 = pneg %p127
      $region22: #{patch_embed_2d.1} parent=5 // pred_check_branch
        %130 = sbr.rel (%p128) target = $region24
      $region23: #{patch_embed_2d.1} parent=5 // pred_region
        // Predicated region
        $region25: #{patch_embed_2d.1} parent=23 // pred_check
          %p131 = pneg %p32
        $region26: #{patch_embed_2d.1} parent=23 // pred_check_branch
          %133 = sbr.rel (%p131) target = $region28
        $region27: #{patch_embed_2d.1} parent=23 // pred_region
          %s134 = smul.u32 2, %s12
          %p135 = scmp.lt.s32.totalorder %s134, 3
          %s136 = scalar_select %p135, %s134, 3
          %s137 = smul.addr %s136, 4
          %s138 = scalar_lea.vmem %s0, %s137
          %s139 = smul.u32 2, %s12
        $region28: #{patch_embed_2d.1} parent=23 // pred_fallthru
          _
      $region24: #{patch_embed_2d.1} parent=5 // pred_fallthru
        _
      %p140 = scmp.le.s32.totalorder 1, %s12
      %p141 = scmp.lt.s32.totalorder %s12, 3
      %p142 = pnand %p140, %p141
      %p143 = pneg %p142
      // Predicated region
      $region29: #{patch_embed_2d.1} parent=5 // pred_check
        _
      $region30: #{patch_embed_2d.1} parent=5 // pred_check_branch
        %145 = sbr.rel (%p142) target = $region32
      $region31: #{patch_embed_2d.1} parent=5 // pred_region
        %s146 = ssub.s32 %s12, 1
        %s147 = smul.u32 2, %s17
        %p148 = scmp.lt.s32.totalorder %s147, 3
        %s149 = scalar_select %p148, %s147, 3
        %s150 = smul.addr %s149, 4
        %s151 = scalar_lea.vmem %s0, %s150
        %p152 = pneg %p38
        %p153 = pneg %p35
        %p154 = pneg %p59
        %p155 = pneg %p56
        %p156 = pneg %p80
        %p157 = pneg %p77
        %p158 = pneg %p106
        %p159 = pneg %p103
        %s160 = sand.u32 %s93, 1
        %s161 = scalar_lea.sflag [#allocation3], %s160
        %s162 = sand.u32 %s93, 1
        %s163 = smul.addr %s162, 16
        %s164 = scalar_lea.vmem [#allocation2], %s163
        %s165 = smul.u32 2, %s17
        %p166 = scmp.lt.s32.totalorder %s165, 3
        %s167 = scalar_select %p166, %s165, 3
        %s168 = smul.addr %s167, 4
        %s169 = scalar_lea.vmem %s0, %s168
        %s170 = smul.u32 2, %s17
        %s171 = smul.u32 2, %s17
        %v173 = vld [vmem:[%s169] sm:$0xf]
        %v174 = vld [vmem:[%s169 + $0x4] sm:$0xf]
        %v175 = vld [vmem:[%s1] sm:$0xf]
        %v176 = vld [vmem:[%s1 + $0x4] sm:$0xf]
        %v177 = vld [vmem:[%s1 + $0x8] sm:$0xf]
        %v178 = vld [vmem:[%s1 + $0xc] sm:$0xf]
        %v179 = vld [vmem:[%s2] sm:$0x1]
        %v181 = vlaneseq
        %v182 = vshrl.u32 %v181, 7
        %v183 = vsub.s32 0, %v182
        %v184 = vrot.slane %v179, %v183
        %v188 = vunpack.c.l.b16 %v173
        %v189 = vunpack.c.l.b16 %v174
        %v190 = vpack.c.b16 %v189, %v188
        %v195 = vunpack.c.l.b16 %v175
        %v196 = vunpack.c.l.b16 %v176
        %v197 = vunpack.c.l.b16 %v177
        %v198 = vunpack.c.l.b16 %v178
        %v199 = vpack.c.b16 %v196, %v195
        %v200 = vpack.c.b16 %v198, %v197
        %vm201 = vcmask 523264
        %v203 = vsel %vm201, %v190, 0
        %v206 = vsel %vm201, %v199, 0
        %v209 = vsel %vm201, %v200, 0
        %211 = vmatprep.subr.bf16.mxu0 0
        %212 = vmatpush1.bf16.xpose.msra.mxu0 %v206
        %213 = vmatprep.subr.bf16.mxu0 0
        %214 = vmatpush1.bf16.xpose.msra.mxu0 %v209
        %215 = vmatprep.subr.bf16.mxu0 0
        %216 = vmatpush1.bf16.xpose.msra.mxu0 0
        %217 = vmatprep.subr.bf16.mxu0 0
        %218 = vmatpush1.bf16.xpose.msra.mxu0 0
        %219 = vmatprep.subr.bf16.mxu0 0
        %220 = vmatpush1.bf16.xpose.msra.mxu0 0
        %221 = vmatprep.subr.bf16.mxu0 0
        %222 = vmatpush1.bf16.xpose.msra.mxu0 0
        %223 = vmatprep.subr.bf16.mxu0 0
        %224 = vmatpush1.bf16.xpose.msra.mxu0 0
        %225 = vmatprep.subr.bf16.mxu0 0
        %226 = vmatpush1.bf16.xpose.msra.mxu0 0
        %227 = vmatprep.subr.bf16.mxu0 0
        %228 = vmatpush1.bf16.xpose.msra.mxu0 0
        %229 = vmatprep.subr.bf16.mxu0 0
        %230 = vmatpush1.bf16.xpose.msra.mxu0 0
        %231 = vmatprep.subr.bf16.mxu0 0
        %232 = vmatpush1.bf16.xpose.msra.mxu0 0
        %233 = vmatprep.subr.bf16.mxu0 0
        %234 = vmatpush1.bf16.xpose.msra.mxu0 0
        %235 = vmatprep.subr.bf16.mxu0 0
        %236 = vmatpush1.bf16.xpose.msra.mxu0 0
        %237 = vmatprep.subr.bf16.mxu0 0
        %238 = vmatpush1.bf16.xpose.msra.mxu0 0
        %239 = vmatprep.subr.bf16.mxu0 0
        %240 = vmatpush1.bf16.xpose.msra.mxu0 0
        %241 = vmatprep.subr.bf16.mxu0 0
        %242 = vmatpush1.bf16.xpose.msra.mxu0 0
        %243 = vmatprep.mubr.bf16.mxu0 0
        %244 = vmatmul.mubr.bf16.gmra.mrb[0].mxu0 %v203
        %v245 = vpop.f32.mrb[0].mxu0
        %v246 = vadd.f32 %v184, %v245
        %v247 = vpop.f32.mrb[0].mxu0
        %v248 = vpop.f32.mrb[0].mxu0
        %v249 = vadd.f32 %v184, %v248
        %v250 = vpop.f32.mrb[0].mxu0
        %251 = vdwg.mxu0
        %vm252 = vcmask 261120
        %253 = vst.msk [vmem:[%s164] sm:$0xff] %vm252, %v246
        %254 = vst.msk [vmem:[%s164 + $0x8] sm:$0xff] %vm252, %v249
        %s255 = sand.u32 %s93, 1
        %s256 = scalar_lea.sflag [#allocation3], %s255
        %s257 = sand.u32 %s93, 1
        %s258 = smul.addr %s257, 16
        %s259 = scalar_lea.vmem [#allocation2], %s258
        // Predicated region
        $region33: #{patch_embed_2d.1} parent=31 // pred_check
          %p260 = pneg %p103
        $region34: #{patch_embed_2d.1} parent=31 // pred_check_branch
          %262 = sbr.rel (%p260) target = $region36
        $region35: #{patch_embed_2d.1} parent=31 // pred_region
          %s263 = smul.u32 2, %s17
          %s265 = ssub.s32 256, 256
          %266 = vsyncadd %s256, %s265
          %s267 = smul.addr %s263, 128
          %s268 = scalar_lea.hbm %s3, %s267
          %s269 = sshll.u32 %s259, 4
          %s270 = int_to_ptr.vmem [resolvable:$true] %s269
          %275 = dma.vmem_to_hbm [thread:$0]  %s270, 256, %s268, %s256, 128, 128, 8
        $region36: #{patch_embed_2d.1} parent=31 // pred_fallthru
          _
      $region32: #{patch_embed_2d.1} parent=5 // pred_fallthru
        _
      %p276 = scmp.le.s32.totalorder 2, %s12
      // Predicated region
      $region37: #{patch_embed_2d.1} parent=5 // pred_check
        %p277 = pneg %p276
      $region38: #{patch_embed_2d.1} parent=5 // pred_check_branch
        %279 = sbr.rel (%p277) target = $region40
      $region39: #{patch_embed_2d.1} parent=5 // pred_region
        %s280 = ssub.s32 %s12, 2
        // Predicated region
        $region41: #{patch_embed_2d.1} parent=39 // pred_check
          %p281 = pneg %p109
        $region42: #{patch_embed_2d.1} parent=39 // pred_check_branch
          %283 = sbr.rel (%p281) target = $region44
        $region43: #{patch_embed_2d.1} parent=39 // pred_region
          %s284 = sand.u32 %s94, 1
          %s285 = scalar_lea.sflag [#allocation3], %s284
          %s286 = sand.u32 %s94, 1
          %s287 = smul.addr %s286, 16
          %s288 = scalar_lea.vmem [#allocation2], %s287
          %289 = dma.done %s285, 256
        $region44: #{patch_embed_2d.1} parent=39 // pred_fallthru
          _
      $region40: #{patch_embed_2d.1} parent=5 // pred_fallthru
        _
    $region6: #{patch_embed_2d.1} parent=1 // loop_footer
      %s16 = sadd.s32 1, %s12
    $region7: #{patch_embed_2d.1} parent=1 // loop_footer_branch
      %11 = sbr.rel target = $region3
    $region8: #{patch_embed_2d.1} parent=1 // loop_exit
      _
    %290 = vsyncpa [#allocation3], 1
    %s291 = scalar_lea.sflag [#allocation3], 1
    %292 = vsyncpa %s291, 1

</llo_original>
